<compile_context>
chip_gen: v5e
topology: v5e:2x2
jax: 0.10.0
libtpu: 0.0.40
codegen_flags: <defaults>
</compile_context>

<pallas_src>
import functools

import jax
import jax.numpy as jnp
from jax.experimental import pallas as pl
from jax.experimental.pallas import tpu as pltpu


def _rotary_freqs_kernel(t_ref, freqs_ref, out_ref, *, pack: int):
    # t_ref:     (TS, pack)       pack consecutive positions per sublane row
    # freqs_ref: (1, dim)         interleave-repeated freqs ([f0,f0,f1,f1,...]), VMEM-resident
    # out_ref:   (TS, pack*dim)   lane-dense f32 angles
    freqs = freqs_ref[...]                                     # (1, dim)
    t = t_ref[...]                                             # (TS, pack)
    # Each piece is a VPU broadcast-multiply: (TS, 1) * (1, dim) -> (TS, dim).
    pieces = [t[:, p:p + 1] * freqs for p in range(pack)]
    if pack == 1:
        out_ref[...] = pieces[0]
    else:
        # Lane concat (XLU slot, idle in this store/HBM-bound kernel) builds a full
        # 128-lane row so the store is a single unmasked vst per vreg.
        out_ref[...] = jnp.concatenate(pieces, axis=-1)


def rotary_embedding_forward(t, freqs_half, *, max_tile_rows: int = 4096):
    """Pallas equivalent of RotaryEmbedding.forward.

    t:          positions, arbitrary shape, any real dtype
    freqs_half: (dim // 2,) frequency parameter / buffer
    returns:    float32 array of shape t.shape + (dim,)
    """
    dim = 2 * int(freqs_half.shape[0])
    lead_shape = t.shape
    seq = 1
    for s in lead_shape:
        seq *= int(s)

    t_flat = t.reshape(seq).astype(jnp.float32)

    # Interleaved repeat [f0, f0, f1, f1, ...] fused into the tiny parameter vector.
    freqs_rep = jnp.repeat(freqs_half.astype(jnp.float32), 2).reshape(1, dim)  # (1, dim)

    # Lane-dense packing factor: pack consecutive positions so the output's last dim
    # is 128 when dim < 128 (otherwise keep dim as-is).
    if dim <= 128 and 128 % dim == 0:
        pack = 128 // dim
    else:
        pack = 1
    lane_dim = pack * dim

    # Tile rows: multiple of 8 sublanes, ~2 MiB per output buffer (double-buffered by
    # the pipeline -> well under the scoped-VMEM default on v5e/v6e/v7x).
    rows_total = -(-seq // pack)
    target_bytes = 2 << 20
    ts = max(8, min(max_tile_rows, (target_bytes // (lane_dim * 4)) // 8 * 8))
    ts = min(ts, ((rows_total + 7) // 8) * 8)      # don't exceed (padded) problem size
    rows_pad = -(-rows_total // ts) * ts
    seq_pad = rows_pad * pack

    t_packed = jnp.pad(t_flat, (0, seq_pad - seq)).reshape(rows_pad, pack)

    grid = (rows_pad // ts,)
    out_packed = pl.pallas_call(
        functools.partial(_rotary_freqs_kernel, pack=pack),
        out_shape=jax.ShapeDtypeStruct((rows_pad, lane_dim), jnp.float32),
        grid=grid,
        in_specs=[
            pl.BlockSpec((ts, pack), lambda i: (i, 0)),     # t tiles stream over seq
            pl.BlockSpec((1, dim), lambda i: (0, 0)),       # freqs stay VMEM-resident
        ],
        out_specs=pl.BlockSpec((ts, lane_dim), lambda i: (i, 0)),
        compiler_params=pltpu.CompilerParams(
            # Independent seq tiles: shard across the 2 TensorCores on v7x
            # (harmless on the single-TC v5e/v6e).
            dimension_semantics=("parallel",),
        ),
        cost_estimate=pl.CostEstimate(
            flops=seq * dim,
            transcendentals=0,
            bytes_accessed=4 * seq + 4 * dim + 4 * seq * dim,
        ),
    )(t_packed, freqs_rep)

    # Un-pack: contiguous row-major reshape (metadata only), then drop padding.
    out = out_packed.reshape(seq_pad, dim)[:seq]
    return out.reshape(*lead_shape, dim)


def init_freqs(theta: int, dim: int) -> jnp.ndarray:
    # Mirrors the module's __init__ exactly, including the as-written operator
    # precedence: 1 / ((theta ** k) / dim).  NOTE: canonical RoPE would be
    # theta ** (k / dim); with theta=10000 and dim >= 64 the as-written form
    # overflows float32, so the demo uses a small theta.
    exponents = jnp.arange(0, dim, 2, dtype=jnp.float32)[: dim // 2]
    return 1.0 / (theta ** exponents / dim)


if __name__ == "__main__":
    theta = 10          # small theta so theta**k stays finite under the as-written formula
    dim = 32
    seq = 8
    learned_freq = False  # only changes Parameter vs buffer in PyTorch; forward math identical

    key = jax.random.PRNGKey(0)
    # Deterministic example "positions" tensor t (forward accepts arbitrary float positions).
    t = jax.random.uniform(key, (seq,), dtype=jnp.float32, minval=0.0, maxval=16.0)

    freqs_half = init_freqs(theta, dim)                       # (dim // 2,)

    out = rotary_embedding_forward(t, freqs_half)
    out = jax.block_until_ready(out)

    # Pure-JAX reference of the PyTorch forward.
    ref = t.astype(jnp.float32)[:, None] * jnp.repeat(freqs_half.astype(jnp.float32), 2)[None, :]
    assert out.shape == (seq, dim)
    assert out.dtype == jnp.float32
    assert jnp.allclose(out, ref, rtol=1e-6, atol=1e-6)

    print("KERNEL_OK")
</pallas_src>

<mosaic_0001>
module attributes {stable_mosaic.version = 11 : i64} {
  func.func @_rotary_freqs_kernel(%arg0: i32, %arg1: memref<8x4xf32, #tpu.memory_space<vmem>>, %arg2: memref<1x32xf32, #tpu.memory_space<vmem>>, %arg3: memref<8x128xf32, #tpu.memory_space<vmem>>) attributes {dimension_semantics = [#tpu.dimension_semantics<parallel>], iteration_bounds = array<i64: 1>, scalar_prefetch = 0 : i64, scratch_operands = 0 : i64, tpu.core_type = #tpu.core_type<tc>, window_params = [{transform_indices = @transform_0, window_bounds = array<i64: 8, 4>}, {pipeline_mode = #tpu.pipeline_mode<synchronous>, transform_indices = @transform_1, window_bounds = array<i64: 1, 32>}, {transform_indices = @transform_2, window_bounds = array<i64: 8, 128>}]} {
    %c0 = arith.constant 0 : index
    %c0_0 = arith.constant 0 : index
    %0 = vector.load %arg2[%c0, %c0_0] : memref<1x32xf32, #tpu.memory_space<vmem>>, vector<1x32xf32>
    %c0_1 = arith.constant 0 : index
    %c0_2 = arith.constant 0 : index
    %1 = vector.load %arg1[%c0_1, %c0_2] : memref<8x4xf32, #tpu.memory_space<vmem>>, vector<8x4xf32>
    %2 = vector.extract_strided_slice %1 {offsets = [0, 0], sizes = [8, 1], strides = [1, 1]} : vector<8x4xf32> to vector<8x1xf32>
    %3 = vector.broadcast %2 : vector<8x1xf32> to vector<8x32xf32>
    %4 = vector.broadcast %0 : vector<1x32xf32> to vector<8x32xf32>
    %5 = arith.mulf %3, %4 : vector<8x32xf32>
    %6 = vector.extract_strided_slice %1 {offsets = [0, 1], sizes = [8, 1], strides = [1, 1]} : vector<8x4xf32> to vector<8x1xf32>
    %7 = vector.broadcast %6 : vector<8x1xf32> to vector<8x32xf32>
    %8 = vector.broadcast %0 : vector<1x32xf32> to vector<8x32xf32>
    %9 = arith.mulf %7, %8 : vector<8x32xf32>
    %10 = vector.extract_strided_slice %1 {offsets = [0, 2], sizes = [8, 1], strides = [1, 1]} : vector<8x4xf32> to vector<8x1xf32>
    %11 = vector.broadcast %10 : vector<8x1xf32> to vector<8x32xf32>
    %12 = vector.broadcast %0 : vector<1x32xf32> to vector<8x32xf32>
    %13 = arith.mulf %11, %12 : vector<8x32xf32>
    %14 = vector.extract_strided_slice %1 {offsets = [0, 3], sizes = [8, 1], strides = [1, 1]} : vector<8x4xf32> to vector<8x1xf32>
    %15 = vector.broadcast %14 : vector<8x1xf32> to vector<8x32xf32>
    %16 = vector.broadcast %0 : vector<1x32xf32> to vector<8x32xf32>
    %17 = arith.mulf %15, %16 : vector<8x32xf32>
    %18 = tpu.concatenate %5, %9, %13, %17 in 1 : vector<8x32xf32>, vector<8x32xf32>, vector<8x32xf32>, vector<8x32xf32> -> vector<8x128xf32>
    %c0_3 = arith.constant 0 : index
    %c0_4 = arith.constant 0 : index
    %19 = vector.load %arg3[%c0_3, %c0_4] : memref<8x128xf32, #tpu.memory_space<vmem>>, vector<8x128xf32>
    tpu.vector_store %arg3[%c0_3, %c0_4], %18 {strides = array<i32>} : memref<8x128xf32, #tpu.memory_space<vmem>>, vector<8x128xf32>,
    return
  }
  func.func @transform_0(%arg0: i32) -> (i32, i32) {
    %c0_i32 = arith.constant 0 : i32
    %c0_i32_0 = arith.constant 0 : i32
    return %arg0, %c0_i32 : i32, i32
  }
  func.func @transform_1(%arg0: i32) -> (i32, i32) {
    %c0_i32 = arith.constant 0 : i32
    %c0_i32_0 = arith.constant 0 : i32
    %c0_i32_1 = arith.constant 0 : i32
    return %c0_i32, %c0_i32_0 : i32, i32
  }
  func.func @transform_2(%arg0: i32) -> (i32, i32) {
    %c0_i32 = arith.constant 0 : i32
    %c0_i32_0 = arith.constant 0 : i32
    return %arg0, %c0_i32 : i32, i32
  }
}

</mosaic_0001>

<llo_original>
// kernel: tpu_custom_call.1
$region0: #{tpu_custom_call.1}
  #allocation0 [shape = 'u32[]', space=smem, size = 0x4, offset = 0x4, fixed_abs, tag = 'smem constant byte address 0x4 - core index']
  #allocation1 [shape = 'u32[72,128]{1,0:T(1,128)}', space=vmem, size = 0x9000, scoped, tag = 'internal scratch']
  %s0 = inlined_call_operand.vmem [shape: f32[8,4], index: 0, kind: input, shape index: {}]
  %s1 = inlined_call_operand.vmem [shape: f32[1,32], index: 1, kind: input, shape index: {}]
  %s2 = inlined_call_operand.hbm [shape: f32[8,128], index: 2, kind: output, shape index: {}]
  %s3 = sld [smem:[#allocation0]]
  $region18: #{tpu_custom_call.1} parent=0
    _
  %s5 = ssub.s32 1, %s3
  %s6 = scalar_select 0, %s5, %s3
  $region1: #{tpu_custom_call.1} parent=0
    #allocation2 [shape = 'u8[4096]{0}', space=vmem, size = 0x1000, scoped, tag = 'output window, operand 0, single buffered']
    #allocation3 [shape = 's32[1]{0}', space=sflag, size = 0x4, scoped, tag = 'scoped memory for tpu_custom_call.1']
    %7 = vsyncpa [#allocation3], 0
    // Predicated region
    $region2: #{tpu_custom_call.1} parent=1 // pred_check
      _
    $region3: #{tpu_custom_call.1} parent=1 // pred_check_branch
      %9 = sbr.rel (0) target = $region5
    $region4: #{tpu_custom_call.1} parent=1 // pred_region
      _
    $region5: #{tpu_custom_call.1} parent=1 // pred_fallthru
      _
    // Predicated region
    $region6: #{tpu_custom_call.1} parent=1 // pred_check
      _
    $region7: #{tpu_custom_call.1} parent=1 // pred_check_branch
      %11 = sbr.rel (0) target = $region9
    $region8: #{tpu_custom_call.1} parent=1 // pred_region
      _
    $region9: #{tpu_custom_call.1} parent=1 // pred_fallthru
      _
    %v12 = vld [vmem:[%s1] sm:$0x1]
    %v13 = vld [vmem:[%s0] sm:$0xff]
    %15 = vset.pattern.permute.xlu0 0
    %16 = vperm.xlu0 %15, %v13
    %v17 = vpop.permute.xlu0 %16
    %v20 = vperm.slane %v12, 0
    %v22 = vmul.f32 %v17, %v20
    %23 = vset.pattern.permute.xlu0 1
    %24 = vperm.xlu0 %23, %v13
    %v25 = vpop.permute.xlu0 %24
    %v27 = vmul.f32 %v25, %v20
    %28 = vset.pattern.permute.xlu0 2
    %29 = vperm.xlu0 %28, %v13
    %v30 = vpop.permute.xlu0 %29
    %v32 = vmul.f32 %v30, %v20
    %33 = vset.pattern.permute.xlu0 3
    %34 = vperm.xlu0 %33, %v13
    %v35 = vpop.permute.xlu0 %34
    %v37 = vmul.f32 %v35, %v20
    %39 = vrot.lane.b32.xlu0 %v27, 32
    %v40 = vpop.permute.xlu0 %39
    %43 = vrot.lane.b32.xlu0 %v32, 64
    %v44 = vpop.permute.xlu0 %43
    %47 = vrot.lane.b32.xlu0 %v37, 96
    %v48 = vpop.permute.xlu0 %47
    %vm50 = vcmask 261120
    %v51 = vsel %vm50, %v22, %v40
    %vm52 = vcmask 523264
    %v53 = vsel %vm52, %v51, %v44
    %vm54 = vcmask 785408
    %v55 = vsel %vm54, %v53, %v48
    %56 = vst [vmem:[#allocation2] sm:$0xff] %v55
    // Predicated region
    $region10: #{tpu_custom_call.1} parent=1 // pred_check
      _
    $region11: #{tpu_custom_call.1} parent=1 // pred_check_branch
      %58 = sbr.rel (0) target = $region13
    $region12: #{tpu_custom_call.1} parent=1 // pred_region
      %60 = vsyncadd [#allocation3], 0
      %s62 = sshll.u32 [#allocation2], 4
      %s63 = int_to_ptr.vmem [resolvable:$true] %s62
      %s64 = sshll.u32 %s2, 4
      %s65 = int_to_ptr.hbm [resolvable:$true] %s64
      %67 = dma.vmem_to_hbm [thread:$0]  %s63, 128, %s65, [#allocation3]
    $region13: #{tpu_custom_call.1} parent=1 // pred_fallthru
      _
    // Predicated region
    $region14: #{tpu_custom_call.1} parent=1 // pred_check
      _
    $region15: #{tpu_custom_call.1} parent=1 // pred_check_branch
      %69 = sbr.rel (0) target = $region17
    $region16: #{tpu_custom_call.1} parent=1 // pred_region
      %71 = dma.done [#allocation3], 128
    $region17: #{tpu_custom_call.1} parent=1 // pred_fallthru
      _
    %72 = vsyncpa [#allocation3], 1

</llo_original>
